<compile_context>
chip_gen: v5e
topology: v5e:2x2
jax: 0.10.0
libtpu: 0.0.40
codegen_flags: <defaults>
</compile_context>

<pallas_src>
import functools

import numpy as np

import jax
import jax.numpy as jnp
from jax.experimental import pallas as pl
from jax.experimental.pallas import tpu as pltpu


# Geometry implied by the PyTorch module (fc1.in_features == 128):
_K1, _S1, _C1 = 8, 6, 16          # conv1: 1 -> 16, k=8, s=6
_K2, _S2, _C2 = 4, 2, 32          # conv2: 16 -> 32, k=4, s=2
_OH2 = _OW2 = 2                   # conv2 output spatial -> 32*2*2 = 128
_NPOS = _OH2 * _OW2               # 4 conv2 output positions
_NTAP = _K2 * _K2                 # 16 conv2 taps
_PATCH = _K1 * _K1                # 64 pixels per conv1 patch
_OUT_LANES = 128                  # lane-dense output slab width


# ---------------------------------------------------------------------------
# Fused Pallas kernel
# ---------------------------------------------------------------------------
def _ppo_fused_kernel(p1_ref, pose_ref, w1_ref, b1_ref, w2_ref, b2_ref,
                      wf1_ref, wpose_ref, bm_ref, wh_ref, bh_ref,
                      out_ref, x_sc, *, batch, n_act):
    B = batch
    A = n_act

    # ---- conv1 (block-diagonal over the 16 conv2 taps) + bias + ReLU. ----
    # p1 rows ordered (pos, b), lanes = (tap, patch).  Result (4B, 256) has
    # lanes = (tap, cin): it is directly conv2's im2col operand.
    y1 = jnp.dot(p1_ref[...], w1_ref[...], preferred_element_type=jnp.float32)
    y1 = jnp.maximum(y1 + b1_ref[...], 0.0)

    # ---- conv2 as one (4B,256)x(256,32) matmul + bias + ReLU. ----
    y2 = jnp.dot(y1.astype(jnp.bfloat16), w2_ref[...],
                 preferred_element_type=jnp.float32)         # (4B, 32)
    y2 = jnp.maximum(y2 + b2_ref[...], 0.0)

    # ---- pos-flatten into lanes of a small bf16 scratch: (B, 128). ----
    for p in range(_NPOS):
        x_sc[:, p * _C2:(p + 1) * _C2] = y2[p * B:(p + 1) * B, :].astype(jnp.bfloat16)

    # ---- merged fc1 / fc_pose.  fc1 comes from the MXU; the tiny pose term
    # is two exact f32 broadcast FMAs (cols 32:64 of the merged 64 features).
    feat = jnp.dot(x_sc[...], wf1_ref[...],
                   preferred_element_type=jnp.float32)        # (B, 64)
    feat = feat + pose_ref[:, 0:1] * wpose_ref[0:1, :] \
                + pose_ref[:, 1:2] * wpose_ref[1:2, :]
    feat = jnp.maximum(feat + bm_ref[...], 0.0)

    # ---- heads padded to 128 lanes: lane 0 = value, lanes 1..A = policy. ----
    head = jnp.dot(feat.astype(jnp.bfloat16), wh_ref[...],
                   preferred_element_type=jnp.float32) + bh_ref[...]   # (B, 128)

    lane = jax.lax.broadcasted_iota(jnp.int32, head.shape, 1)
    pol_mask = (lane >= 1) & (lane <= A)
    logits = jnp.where(pol_mask, head, -jnp.inf)
    m = jnp.max(logits, axis=-1, keepdims=True)
    e = jnp.exp(logits - m)                                   # pad lanes -> 0
    pol = e / jnp.sum(e, axis=-1, keepdims=True)              # exact normalize

    # ---- single unmasked lane-dense store: [val | pol | zeros]. ----
    out_ref[...] = jnp.where(lane == 0, head, pol)


# ---------------------------------------------------------------------------
# Static index table: conv1 patches, rows ordered (conv2-pos, batch) with the
# batch offset baked in, lanes ordered (conv2-tap, conv1-patch-pixel).
# ---------------------------------------------------------------------------
def _conv_gather_indices(B, H, W):
    base = np.empty((_NPOS, _NTAP * _PATCH), dtype=np.int32)
    for oh2 in range(_OH2):
        for ow2 in range(_OW2):
            pos = oh2 * _OW2 + ow2
            for kh2 in range(_K2):
                for kw2 in range(_K2):
                    q = kh2 * _K2 + kw2
                    h1 = _S2 * oh2 + kh2      # conv1 output position feeding this tap
                    w1 = _S2 * ow2 + kw2
                    for kh1 in range(_K1):
                        for kw1 in range(_K1):
                            r = _S1 * h1 + kh1
                            c = _S1 * w1 + kw1
                            base[pos, q * _PATCH + kh1 * _K1 + kw1] = r * W + c
    # Bake the batch offset in so ONE jnp.take yields rows already ordered
    # (pos, b) — no wrapper-side transpose/moveaxis.
    idx = base[:, None, :] + (np.arange(B, dtype=np.int32) * (H * W))[None, :, None]
    return idx.reshape(_NPOS * B, _NTAP * _PATCH)


# ---------------------------------------------------------------------------
# Parameter prep: fold NCHW orderings / re-layouts / layer merges into weights
# ---------------------------------------------------------------------------
def prepare_fused_params(params, mxu_dtype=jnp.bfloat16):
    A = params["w_fc_pol"].shape[0]

    # conv1 weight (16,1,8,8) -> (64,16), then block-diagonal over the 16
    # conv2 taps -> (1024, 256) so conv1's output lanes are already (tap, cin).
    w_conv1 = np.asarray(params["w_conv1"], np.float32).reshape(_C1, _PATCH).T
    w1 = np.zeros((_NTAP * _PATCH, _NTAP * _C1), np.float32)
    for q in range(_NTAP):
        w1[q * _PATCH:(q + 1) * _PATCH, q * _C1:(q + 1) * _C1] = w_conv1
    b1 = np.tile(np.asarray(params["b_conv1"], np.float32), _NTAP).reshape(1, -1)

    # conv2 weight (32,16,4,4) -> K-ordering (kh2,kw2,cin) -> (256,32).
    w2 = np.asarray(params["w_conv2"], np.float32).transpose(0, 2, 3, 1) \
           .reshape(_C2, -1).T
    b2 = np.asarray(params["b_conv2"], np.float32).reshape(1, _C2)

    # fc1: permute input features from NCHW-flatten (c,pos) to our (pos,c)
    # lane order; place into cols 0:32 of a (128,64) merged weight.  fc_pose
    # occupies cols 32:64 of a separate tiny (2,64) f32 weight (applied as
    # broadcast FMAs in-kernel).
    perm = np.array([c * _NPOS + p for p in range(_NPOS) for c in range(_C2)],
                    dtype=np.int32)
    wf1 = np.zeros((_NPOS * _C2, 64), np.float32)
    wf1[:, :32] = np.asarray(params["w_fc1"], np.float32)[:, perm].T
    wpose = np.zeros((2, 64), np.float32)
    wpose[:, 32:] = np.asarray(params["w_fc_pose"], np.float32).T
    bm = np.concatenate([np.asarray(params["b_fc1"], np.float32),
                         np.asarray(params["b_fc_pose"], np.float32)]).reshape(1, 64)

    # heads padded to a lane-dense 128-wide output: col 0 = value, 1..A = policy.
    wh = np.zeros((64, _OUT_LANES), np.float32)
    wh[:, 0:1] = np.asarray(params["w_fc_val"], np.float32).T
    wh[:, 1:1 + A] = np.asarray(params["w_fc_pol"], np.float32).T
    bh = np.zeros((1, _OUT_LANES), np.float32)
    bh[0, 0] = np.asarray(params["b_fc_val"], np.float32)[0]
    bh[0, 1:1 + A] = np.asarray(params["b_fc_pol"], np.float32)

    return dict(
        w1=jnp.asarray(w1, mxu_dtype), b1=jnp.asarray(b1, jnp.float32),
        w2=jnp.asarray(w2, mxu_dtype), b2=jnp.asarray(b2, jnp.float32),
        wf1=jnp.asarray(wf1, mxu_dtype), wpose=jnp.asarray(wpose, jnp.float32),
        bm=jnp.asarray(bm, jnp.float32),
        wh=jnp.asarray(wh, mxu_dtype), bh=jnp.asarray(bh, jnp.float32),
    )


# ---------------------------------------------------------------------------
# Forward pass (mirrors PPOPolicy.forward)
# ---------------------------------------------------------------------------
def ppo_policy_forward(fused, frame, robot_pose, n_act):
    B, C, H, W = frame.shape
    assert C == 1, "conv1 expects a single input channel"
    assert (H - _K1) // _S1 + 1 == _S2 * (_OH2 - 1) + _K2, \
        "input height inconsistent with fc1.in_features == 128"
    assert (W - _K1) // _S1 + 1 == _S2 * (_OW2 - 1) + _K2, \
        "input width inconsistent with fc1.in_features == 128"
    A = n_act

    # conv1 im2col as a single static gather; rows already ordered (pos, b).
    idx = jnp.asarray(_conv_gather_indices(B, H, W))            # (4B, 1024)
    p1 = jnp.take(frame.reshape(-1), idx, axis=0).astype(fused["w1"].dtype)

    kernel = functools.partial(_ppo_fused_kernel, batch=B, n_act=A)
    out = pl.pallas_call(
        kernel,
        out_shape=jax.ShapeDtypeStruct((B, _OUT_LANES), jnp.float32),
        in_specs=[pl.BlockSpec(memory_space=pltpu.MemorySpace.VMEM)] * 11,
        out_specs=pl.BlockSpec(memory_space=pltpu.MemorySpace.VMEM),
        scratch_shapes=[
            pltpu.VMEM((B, _NPOS * _C2), jnp.bfloat16),   # (pos,c)-flatten, bf16
        ],
    )(p1, robot_pose.astype(jnp.float32),
      fused["w1"], fused["b1"], fused["w2"], fused["b2"],
      fused["wf1"], fused["wpose"], fused["bm"], fused["wh"], fused["bh"])

    val = out[:, 0:1]
    pol = out[:, 1:1 + A]
    return val, pol


# ---------------------------------------------------------------------------
# Deterministic synthetic params (PyTorch param shapes) + pure-JAX reference
# ---------------------------------------------------------------------------
def init_params(key, action_space_size):
    keys = jax.random.split(key, 12)

    def w(k, shape, scale=0.05):
        return scale * jax.random.normal(k, shape, dtype=jnp.float32)

    return {
        "w_conv1": w(keys[0], (16, 1, 8, 8)),
        "b_conv1": w(keys[1], (16,)),
        "w_conv2": w(keys[2], (32, 16, 4, 4)),
        "b_conv2": w(keys[3], (32,)),
        "w_fc1": w(keys[4], (32, 128)),
        "b_fc1": w(keys[5], (32,)),
        "w_fc_pose": w(keys[6], (32, 2)),
        "b_fc_pose": w(keys[7], (32,)),
        "w_fc_val": w(keys[8], (1, 64)),
        "b_fc_val": w(keys[9], (1,)),
        "w_fc_pol": w(keys[10], (action_space_size, 64)),
        "b_fc_pol": w(keys[11], (action_space_size,)),
    }


def ppo_policy_reference(params, frame, robot_pose):
    dn = ("NCHW", "OIHW", "NCHW")
    y = jax.lax.conv_general_dilated(frame, params["w_conv1"], (_S1, _S1),
                                     "VALID", dimension_numbers=dn)
    y = jax.nn.relu(y + params["b_conv1"].reshape(1, -1, 1, 1))
    y = jax.lax.conv_general_dilated(y, params["w_conv2"], (_S2, _S2),
                                     "VALID", dimension_numbers=dn)
    y = jax.nn.relu(y + params["b_conv2"].reshape(1, -1, 1, 1))
    flat = y.reshape(y.shape[0], -1)
    h = jax.nn.relu(flat @ params["w_fc1"].T + params["b_fc1"])
    hp = jax.nn.relu(robot_pose @ params["w_fc_pose"].T + params["b_fc_pose"])
    feat = jnp.concatenate([h, hp], axis=1)
    val = feat @ params["w_fc_val"].T + params["b_fc_val"]
    pol = jax.nn.softmax(feat @ params["w_fc_pol"].T + params["b_fc_pol"], axis=1)
    return val, pol


if __name__ == "__main__":
    key = jax.random.PRNGKey(0)
    k_param, k_frame, k_pose = jax.random.split(key, 3)

    ACTION_SPACE = 4
    B = 2
    # 38x38 input -> conv1 -> 6x6 -> conv2 -> 2x2 -> 32*2*2 = 128 (fc1 in_features)
    frame = jax.random.normal(k_frame, (B, 1, 38, 38), dtype=jnp.float32)
    robot_pose = jax.random.normal(k_pose, (B, 2), dtype=jnp.float32)

    params = init_params(k_param, ACTION_SPACE)
    fused = prepare_fused_params(params)

    fwd = jax.jit(ppo_policy_forward, static_argnames=("n_act",))
    val, pol = jax.block_until_ready(fwd(fused, frame, robot_pose, n_act=ACTION_SPACE))

    assert val.shape == (B, 1), val.shape
    assert pol.shape == (B, ACTION_SPACE), pol.shape
    assert bool(jnp.all(jnp.abs(jnp.sum(pol, axis=1) - 1.0) < 2e-3))

    # Check against the pure-JAX f32 reference (loose tol: bf16 MXU operands).
    val_ref, pol_ref = ppo_policy_reference(params, frame, robot_pose)
    assert bool(jnp.max(jnp.abs(val - val_ref)) < 5e-3)
    assert bool(jnp.max(jnp.abs(pol - pol_ref)) < 5e-3)

    print("KERNEL_OK")
</pallas_src>

<mosaic_0001>
module attributes {stable_mosaic.version = 11 : i64} {
  func.func @_ppo_fused_kernel(%arg0: memref<8x1024xbf16, #tpu.memory_space<vmem>>, %arg1: memref<2x2xf32, #tpu.memory_space<vmem>>, %arg2: memref<1024x256xbf16, #tpu.memory_space<vmem>>, %arg3: memref<1x256xf32, #tpu.memory_space<vmem>>, %arg4: memref<256x32xbf16, #tpu.memory_space<vmem>>, %arg5: memref<1x32xf32, #tpu.memory_space<vmem>>, %arg6: memref<128x64xbf16, #tpu.memory_space<vmem>>, %arg7: memref<2x64xf32, #tpu.memory_space<vmem>>, %arg8: memref<1x64xf32, #tpu.memory_space<vmem>>, %arg9: memref<64x128xbf16, #tpu.memory_space<vmem>>, %arg10: memref<1x128xf32, #tpu.memory_space<vmem>>, %arg11: memref<2x128xf32, #tpu.memory_space<vmem>>, %arg12: memref<2x128xbf16, #tpu.memory_space<vmem>>) attributes {dimension_semantics = [], scalar_prefetch = 0 : i64, scratch_operands = 1 : i64, tpu.core_type = #tpu.core_type<tc>} {
    %c0 = arith.constant 0 : index
    %c0_0 = arith.constant 0 : index
    %0 = vector.load %arg0[%c0, %c0_0] : memref<8x1024xbf16, #tpu.memory_space<vmem>>, vector<8x1024xbf16>
    %c0_1 = arith.constant 0 : index
    %c0_2 = arith.constant 0 : index
    %1 = vector.load %arg2[%c0_1, %c0_2] : memref<1024x256xbf16, #tpu.memory_space<vmem>>, vector<1024x256xbf16>
    %cst = arith.constant dense<0.000000e+00> : vector<8x256xf32>
    %2 = tpu.matmul %0, %1, %cst {dimension_numbers = #tpu.dot_dimension_numbers<[1], [0], [0], [1], [0, 0, 1, 1], [], []>} : vector<8x1024xbf16>, vector<1024x256xbf16>, vector<8x256xf32> -> vector<8x256xf32>
    %c0_3 = arith.constant 0 : index
    %c0_4 = arith.constant 0 : index
    %3 = vector.load %arg3[%c0_3, %c0_4] : memref<1x256xf32, #tpu.memory_space<vmem>>, vector<1x256xf32>
    %4 = vector.broadcast %3 : vector<1x256xf32> to vector<8x256xf32>
    %5 = arith.addf %2, %4 : vector<8x256xf32>
    %cst_5 = arith.constant 0.000000e+00 : f32
    %6 = vector.broadcast %cst_5 : f32 to vector<8x256xf32>
    %7 = arith.maximumf %5, %6 : vector<8x256xf32>
    %8 = arith.truncf %7 : vector<8x256xf32> to vector<8x256xbf16>
    %c0_6 = arith.constant 0 : index
    %c0_7 = arith.constant 0 : index
    %9 = vector.load %arg4[%c0_6, %c0_7] : memref<256x32xbf16, #tpu.memory_space<vmem>>, vector<256x32xbf16>
    %cst_8 = arith.constant dense<0.000000e+00> : vector<8x32xf32>
    %10 = tpu.matmul %8, %9, %cst_8 {dimension_numbers = #tpu.dot_dimension_numbers<[1], [0], [0], [1], [0, 0, 1, 1], [], []>} : vector<8x256xbf16>, vector<256x32xbf16>, vector<8x32xf32> -> vector<8x32xf32>
    %c0_9 = arith.constant 0 : index
    %c0_10 = arith.constant 0 : index
    %11 = vector.load %arg5[%c0_9, %c0_10] : memref<1x32xf32, #tpu.memory_space<vmem>>, vector<1x32xf32>
    %12 = vector.broadcast %11 : vector<1x32xf32> to vector<8x32xf32>
    %13 = arith.addf %10, %12 : vector<8x32xf32>
    %cst_11 = arith.constant 0.000000e+00 : f32
    %14 = vector.broadcast %cst_11 : f32 to vector<8x32xf32>
    %15 = arith.maximumf %13, %14 : vector<8x32xf32>
    %16 = vector.extract_strided_slice %15 {offsets = [0, 0], sizes = [2, 32], strides = [1, 1]} : vector<8x32xf32> to vector<2x32xf32>
    %17 = arith.truncf %16 : vector<2x32xf32> to vector<2x32xbf16>
    %c0_12 = arith.constant 0 : index
    %c0_13 = arith.constant 0 : index
    %18 = vector.load %arg12[%c0_12, %c0_13] : memref<2x128xbf16, #tpu.memory_space<vmem>>, vector<2x32xbf16>
    tpu.vector_store %arg12[%c0_12, %c0_13], %17 {strides = array<i32>} : memref<2x128xbf16, #tpu.memory_space<vmem>>, vector<2x32xbf16>,
    %19 = vector.extract_strided_slice %15 {offsets = [2, 0], sizes = [2, 32], strides = [1, 1]} : vector<8x32xf32> to vector<2x32xf32>
    %20 = arith.truncf %19 : vector<2x32xf32> to vector<2x32xbf16>
    %c0_14 = arith.constant 0 : index
    %c32 = arith.constant 32 : index
    %21 = vector.load %arg12[%c0_14, %c32] : memref<2x128xbf16, #tpu.memory_space<vmem>>, vector<2x32xbf16>
    tpu.vector_store %arg12[%c0_14, %c32], %20 {strides = array<i32>} : memref<2x128xbf16, #tpu.memory_space<vmem>>, vector<2x32xbf16>,
    %22 = vector.extract_strided_slice %15 {offsets = [4, 0], sizes = [2, 32], strides = [1, 1]} : vector<8x32xf32> to vector<2x32xf32>
    %23 = arith.truncf %22 : vector<2x32xf32> to vector<2x32xbf16>
    %c0_15 = arith.constant 0 : index
    %c64 = arith.constant 64 : index
    %24 = vector.load %arg12[%c0_15, %c64] : memref<2x128xbf16, #tpu.memory_space<vmem>>, vector<2x32xbf16>
    tpu.vector_store %arg12[%c0_15, %c64], %23 {strides = array<i32>} : memref<2x128xbf16, #tpu.memory_space<vmem>>, vector<2x32xbf16>,
    %25 = vector.extract_strided_slice %15 {offsets = [6, 0], sizes = [2, 32], strides = [1, 1]} : vector<8x32xf32> to vector<2x32xf32>
    %26 = arith.truncf %25 : vector<2x32xf32> to vector<2x32xbf16>
    %c0_16 = arith.constant 0 : index
    %c96 = arith.constant 96 : index
    %27 = vector.load %arg12[%c0_16, %c96] : memref<2x128xbf16, #tpu.memory_space<vmem>>, vector<2x32xbf16>
    tpu.vector_store %arg12[%c0_16, %c96], %26 {strides = array<i32>} : memref<2x128xbf16, #tpu.memory_space<vmem>>, vector<2x32xbf16>,
    %c0_17 = arith.constant 0 : index
    %c0_18 = arith.constant 0 : index
    %28 = vector.load %arg12[%c0_17, %c0_18] : memref<2x128xbf16, #tpu.memory_space<vmem>>, vector<2x128xbf16>
    %c0_19 = arith.constant 0 : index
    %c0_20 = arith.constant 0 : index
    %29 = vector.load %arg6[%c0_19, %c0_20] : memref<128x64xbf16, #tpu.memory_space<vmem>>, vector<128x64xbf16>
    %cst_21 = arith.constant dense<0.000000e+00> : vector<2x64xf32>
    %30 = tpu.matmul %28, %29, %cst_21 {dimension_numbers = #tpu.dot_dimension_numbers<[1], [0], [0], [1], [0, 0, 1, 1], [], []>} : vector<2x128xbf16>, vector<128x64xbf16>, vector<2x64xf32> -> vector<2x64xf32>
    %c0_22 = arith.constant 0 : index
    %c0_23 = arith.constant 0 : index
    %31 = vector.load %arg1[%c0_22, %c0_23] : memref<2x2xf32, #tpu.memory_space<vmem>>, vector<2x1xf32>
    %c0_24 = arith.constant 0 : index
    %c0_25 = arith.constant 0 : index
    %32 = vector.load %arg7[%c0_24, %c0_25] : memref<2x64xf32, #tpu.memory_space<vmem>>, vector<1x64xf32>
    %33 = vector.broadcast %31 : vector<2x1xf32> to vector<2x64xf32>
    %34 = vector.broadcast %32 : vector<1x64xf32> to vector<2x64xf32>
    %35 = arith.mulf %33, %34 : vector<2x64xf32>
    %36 = arith.addf %30, %35 : vector<2x64xf32>
    %c0_26 = arith.constant 0 : index
    %c1 = arith.constant 1 : index
    %37 = vector.load %arg1[%c0_26, %c1] : memref<2x2xf32, #tpu.memory_space<vmem>>, vector<2x1xf32>
    %c1_27 = arith.constant 1 : index
    %c0_28 = arith.constant 0 : index
    %38 = vector.load %arg7[%c1_27, %c0_28] : memref<2x64xf32, #tpu.memory_space<vmem>>, vector<1x64xf32>
    %39 = vector.broadcast %37 : vector<2x1xf32> to vector<2x64xf32>
    %40 = vector.broadcast %38 : vector<1x64xf32> to vector<2x64xf32>
    %41 = arith.mulf %39, %40 : vector<2x64xf32>
    %42 = arith.addf %36, %41 : vector<2x64xf32>
    %c0_29 = arith.constant 0 : index
    %c0_30 = arith.constant 0 : index
    %43 = vector.load %arg8[%c0_29, %c0_30] : memref<1x64xf32, #tpu.memory_space<vmem>>, vector<1x64xf32>
    %44 = vector.broadcast %43 : vector<1x64xf32> to vector<2x64xf32>
    %45 = arith.addf %42, %44 : vector<2x64xf32>
    %cst_31 = arith.constant 0.000000e+00 : f32
    %46 = vector.broadcast %cst_31 : f32 to vector<2x64xf32>
    %47 = arith.maximumf %45, %46 : vector<2x64xf32>
    %48 = arith.truncf %47 : vector<2x64xf32> to vector<2x64xbf16>
    %c0_32 = arith.constant 0 : index
    %c0_33 = arith.constant 0 : index
    %49 = vector.load %arg9[%c0_32, %c0_33] : memref<64x128xbf16, #tpu.memory_space<vmem>>, vector<64x128xbf16>
    %cst_34 = arith.constant dense<0.000000e+00> : vector<2x128xf32>
    %50 = tpu.matmul %48, %49, %cst_34 {dimension_numbers = #tpu.dot_dimension_numbers<[1], [0], [0], [1], [0, 0, 1, 1], [], []>} : vector<2x64xbf16>, vector<64x128xbf16>, vector<2x128xf32> -> vector<2x128xf32>
    %c0_35 = arith.constant 0 : index
    %c0_36 = arith.constant 0 : index
    %51 = vector.load %arg10[%c0_35, %c0_36] : memref<1x128xf32, #tpu.memory_space<vmem>>, vector<1x128xf32>
    %52 = vector.broadcast %51 : vector<1x128xf32> to vector<2x128xf32>
    %53 = arith.addf %50, %52 : vector<2x128xf32>
    %54 = tpu.iota {dimensions = array<i32: 1>} : vector<2x128xi32>
    %c1_i32 = arith.constant 1 : i32
    %55 = vector.broadcast %c1_i32 : i32 to vector<2x128xi32>
    %56 = arith.cmpi sge, %54, %55 : vector<2x128xi32>
    %c4_i32 = arith.constant 4 : i32
    %57 = vector.broadcast %c4_i32 : i32 to vector<2x128xi32>
    %58 = arith.cmpi sle, %54, %57 : vector<2x128xi32>
    %59 = arith.andi %56, %58 : vector<2x128xi1>
    %cst_37 = arith.constant 0xFF800000 : f32
    %60 = vector.broadcast %cst_37 : f32 to vector<2x128xf32>
    %61 = arith.select %59, %53, %60 : vector<2x128xi1>, vector<2x128xf32>
    %cst_38 = arith.constant dense<0xFF800000> : vector<2xf32>
    %62 = vector.multi_reduction <maximumf>, %61, %cst_38 [1] : vector<2x128xf32> to vector<2xf32>
    %63 = vector.shape_cast %62 : vector<2xf32> to vector<2x1xf32>
    %64 = vector.broadcast %63 : vector<2x1xf32> to vector<2x128xf32>
    %65 = arith.subf %61, %64 : vector<2x128xf32>
    %66 = math.exp %65 : vector<2x128xf32>
    %cst_39 = arith.constant dense<0.000000e+00> : vector<2xf32>
    %67 = vector.multi_reduction <add>, %66, %cst_39 [1] : vector<2x128xf32> to vector<2xf32>
    %68 = vector.shape_cast %67 : vector<2xf32> to vector<2x1xf32>
    %69 = vector.broadcast %68 : vector<2x1xf32> to vector<2x128xf32>
    %70 = arith.divf %66, %69 : vector<2x128xf32>
    %c0_i32 = arith.constant 0 : i32
    %71 = vector.broadcast %c0_i32 : i32 to vector<2x128xi32>
    %72 = arith.cmpi eq, %54, %71 : vector<2x128xi32>
    %73 = arith.select %72, %53, %70 : vector<2x128xi1>, vector<2x128xf32>
    %c0_40 = arith.constant 0 : index
    %c0_41 = arith.constant 0 : index
    %74 = vector.load %arg11[%c0_40, %c0_41] : memref<2x128xf32, #tpu.memory_space<vmem>>, vector<2x128xf32>
    tpu.vector_store %arg11[%c0_40, %c0_41], %73 {strides = array<i32>} : memref<2x128xf32, #tpu.memory_space<vmem>>, vector<2x128xf32>,
    return
  }
}

</mosaic_0001>

<llo_original>
// kernel: ppo_policy_forward.1
$region0: #{ppo_policy_forward.1}
  #allocation0 [shape = 'u32[]', space=smem, size = 0x4, offset = 0x4, fixed_abs, tag = 'smem constant byte address 0x4 - core index']
  #allocation1 [shape = 'u32[72,128]{1,0:T(1,128)}', space=vmem, size = 0x9000, scoped, tag = 'internal scratch']
  #allocation2 [shape = 'bf16[2,128]{1,0:T(2,128)(2,1)}', space=vmem, size = 0x200, scoped, tag = 'scratch operand']
  %s0 = inlined_call_operand.vmem [shape: bf16[8,1024], index: 0, kind: input, shape index: {}]
  %s1 = inlined_call_operand.vmem [shape: f32[2,2], index: 1, kind: input, shape index: {}]
  %s2 = inlined_call_operand.vmem [shape: bf16[1024,256], index: 2, kind: input, shape index: {}]
  %s3 = inlined_call_operand.vmem [shape: f32[1,256], index: 3, kind: input, shape index: {}]
  %s4 = inlined_call_operand.vmem [shape: bf16[256,32], index: 4, kind: input, shape index: {}]
  %s5 = inlined_call_operand.vmem [shape: f32[1,32], index: 5, kind: input, shape index: {}]
  %s6 = inlined_call_operand.vmem [shape: bf16[128,64], index: 6, kind: input, shape index: {}]
  %s7 = inlined_call_operand.vmem [shape: f32[2,64], index: 7, kind: input, shape index: {}]
  %s8 = inlined_call_operand.vmem [shape: f32[1,64], index: 8, kind: input, shape index: {}]
  %s9 = inlined_call_operand.vmem [shape: bf16[64,128], index: 9, kind: input, shape index: {}]
  %s10 = inlined_call_operand.vmem [shape: f32[1,128], index: 10, kind: input, shape index: {}]
  %s11 = inlined_call_operand.vmem [shape: f32[2,128], index: 11, kind: output, shape index: {}]
  %s12 = sld [smem:[#allocation0]]
  $region54: #{ppo_policy_forward.1} parent=0
    _
  %s14 = ssub.s32 1, %s12
  %s15 = scalar_select 0, %s14, %s12
  // Predicated region
  $region2: #{ppo_policy_forward.1} parent=0 // pred_check
    _
  $region3: #{ppo_policy_forward.1} parent=0 // pred_check_branch
    %17 = sbr.rel (0) target = $region5
  $region4: #{ppo_policy_forward.1} parent=0 // pred_region
    _
  $region5: #{ppo_policy_forward.1} parent=0 // pred_fallthru
    _
  // Predicated region
  $region6: #{ppo_policy_forward.1} parent=0 // pred_check
    _
  $region7: #{ppo_policy_forward.1} parent=0 // pred_check_branch
    %19 = sbr.rel (0) target = $region9
  $region8: #{ppo_policy_forward.1} parent=0 // pred_region
    _
  $region9: #{ppo_policy_forward.1} parent=0 // pred_fallthru
    _
  // Predicated region
  $region10: #{ppo_policy_forward.1} parent=0 // pred_check
    _
  $region11: #{ppo_policy_forward.1} parent=0 // pred_check_branch
    %21 = sbr.rel (0) target = $region13
  $region12: #{ppo_policy_forward.1} parent=0 // pred_region
    _
  $region13: #{ppo_policy_forward.1} parent=0 // pred_fallthru
    _
  // Predicated region
  $region14: #{ppo_policy_forward.1} parent=0 // pred_check
    _
  $region15: #{ppo_policy_forward.1} parent=0 // pred_check_branch
    %23 = sbr.rel (0) target = $region17
  $region16: #{ppo_policy_forward.1} parent=0 // pred_region
    _
  $region17: #{ppo_policy_forward.1} parent=0 // pred_fallthru
    _
  // Predicated region
  $region18: #{ppo_policy_forward.1} parent=0 // pred_check
    _
  $region19: #{ppo_policy_forward.1} parent=0 // pred_check_branch
    %25 = sbr.rel (0) target = $region21
  $region20: #{ppo_policy_forward.1} parent=0 // pred_region
    _
  $region21: #{ppo_policy_forward.1} parent=0 // pred_fallthru
    _
  // Predicated region
  $region22: #{ppo_policy_forward.1} parent=0 // pred_check
    _
  $region23: #{ppo_policy_forward.1} parent=0 // pred_check_branch
    %27 = sbr.rel (0) target = $region25
  $region24: #{ppo_policy_forward.1} parent=0 // pred_region
    _
  $region25: #{ppo_policy_forward.1} parent=0 // pred_fallthru
    _
  // Predicated region
  $region26: #{ppo_policy_forward.1} parent=0 // pred_check
    _
  $region27: #{ppo_policy_forward.1} parent=0 // pred_check_branch
    %29 = sbr.rel (0) target = $region29
  $region28: #{ppo_policy_forward.1} parent=0 // pred_region
    _
  $region29: #{ppo_policy_forward.1} parent=0 // pred_fallthru
    _
  // Predicated region
  $region30: #{ppo_policy_forward.1} parent=0 // pred_check
    _
  $region31: #{ppo_policy_forward.1} parent=0 // pred_check_branch
    %31 = sbr.rel (0) target = $region33
  $region32: #{ppo_policy_forward.1} parent=0 // pred_region
    _
  $region33: #{ppo_policy_forward.1} parent=0 // pred_fallthru
    _
  // Predicated region
  $region34: #{ppo_policy_forward.1} parent=0 // pred_check
    _
  $region35: #{ppo_policy_forward.1} parent=0 // pred_check_branch
    %33 = sbr.rel (0) target = $region37
  $region36: #{ppo_policy_forward.1} parent=0 // pred_region
    _
  $region37: #{ppo_policy_forward.1} parent=0 // pred_fallthru
    _
  // Predicated region
  $region38: #{ppo_policy_forward.1} parent=0 // pred_check
    _
  $region39: #{ppo_policy_forward.1} parent=0 // pred_check_branch
    %35 = sbr.rel (0) target = $region41
  $region40: #{ppo_policy_forward.1} parent=0 // pred_region
    _
  $region41: #{ppo_policy_forward.1} parent=0 // pred_fallthru
    _
  // Predicated region
  $region42: #{ppo_policy_forward.1} parent=0 // pred_check
    _
  $region43: #{ppo_policy_forward.1} parent=0 // pred_check_branch
    %37 = sbr.rel (0) target = $region45
  $region44: #{ppo_policy_forward.1} parent=0 // pred_region
    _
  $region45: #{ppo_policy_forward.1} parent=0 // pred_fallthru
    _
  %v39 = vld [vmem:[%s0] sm:$0xff]
  %v40 = vld [vmem:[%s0 + $0x8] sm:$0xff]
  %v41 = vld [vmem:[%s0 + $0x10] sm:$0xff]
  %v42 = vld [vmem:[%s0 + $0x18] sm:$0xff]
  %v43 = vld [vmem:[%s2] sm:$0xff]
  %v44 = vld [vmem:[%s2 + $0x8] sm:$0xff]
  %v45 = vld [vmem:[%s2 + $0x10] sm:$0xff]
  %v46 = vld [vmem:[%s2 + $0x18] sm:$0xff]
  %v47 = vld [vmem:[%s2 + $0x20] sm:$0xff]
  %v48 = vld [vmem:[%s2 + $0x28] sm:$0xff]
  %v49 = vld [vmem:[%s2 + $0x30] sm:$0xff]
  %v50 = vld [vmem:[%s2 + $0x38] sm:$0xff]
  %v51 = vld [vmem:[%s2 + $0x40] sm:$0xff]
  %v52 = vld [vmem:[%s2 + $0x48] sm:$0xff]
  %v53 = vld [vmem:[%s2 + $0x50] sm:$0xff]
  %v54 = vld [vmem:[%s2 + $0x58] sm:$0xff]
  %v55 = vld [vmem:[%s2 + $0x60] sm:$0xff]
  %v56 = vld [vmem:[%s2 + $0x68] sm:$0xff]
  %v57 = vld [vmem:[%s2 + $0x70] sm:$0xff]
  %v58 = vld [vmem:[%s2 + $0x78] sm:$0xff]
  %v59 = vld [vmem:[%s2 + $0x80] sm:$0xff]
  %v60 = vld [vmem:[%s2 + $0x88] sm:$0xff]
  %v61 = vld [vmem:[%s2 + $0x90] sm:$0xff]
  %v62 = vld [vmem:[%s2 + $0x98] sm:$0xff]
  %v63 = vld [vmem:[%s2 + $0xa0] sm:$0xff]
  %v64 = vld [vmem:[%s2 + $0xa8] sm:$0xff]
  %v65 = vld [vmem:[%s2 + $0xb0] sm:$0xff]
  %v66 = vld [vmem:[%s2 + $0xb8] sm:$0xff]
  %v67 = vld [vmem:[%s2 + $0xc0] sm:$0xff]
  %v68 = vld [vmem:[%s2 + $0xc8] sm:$0xff]
  %v69 = vld [vmem:[%s2 + $0xd0] sm:$0xff]
  %v70 = vld [vmem:[%s2 + $0xd8] sm:$0xff]
  %v71 = vld [vmem:[%s2 + $0xe0] sm:$0xff]
  %v72 = vld [vmem:[%s2 + $0xe8] sm:$0xff]
  %v73 = vld [vmem:[%s2 + $0xf0] sm:$0xff]
  %v74 = vld [vmem:[%s2 + $0xf8] sm:$0xff]
  %v75 = vld [vmem:[%s2 + $0x100] sm:$0xff]
  %v76 = vld [vmem:[%s2 + $0x108] sm:$0xff]
  %v77 = vld [vmem:[%s2 + $0x110] sm:$0xff]
  %v78 = vld [vmem:[%s2 + $0x118] sm:$0xff]
  %v79 = vld [vmem:[%s2 + $0x120] sm:$0xff]
  %v80 = vld [vmem:[%s2 + $0x128] sm:$0xff]
  %v81 = vld [vmem:[%s2 + $0x130] sm:$0xff]
  %v82 = vld [vmem:[%s2 + $0x138] sm:$0xff]
  %v83 = vld [vmem:[%s2 + $0x140] sm:$0xff]
  %v84 = vld [vmem:[%s2 + $0x148] sm:$0xff]
  %v85 = vld [vmem:[%s2 + $0x150] sm:$0xff]
  %v86 = vld [vmem:[%s2 + $0x158] sm:$0xff]
  %v87 = vld [vmem:[%s2 + $0x160] sm:$0xff]
  %v88 = vld [vmem:[%s2 + $0x168] sm:$0xff]
  %v89 = vld [vmem:[%s2 + $0x170] sm:$0xff]
  %v90 = vld [vmem:[%s2 + $0x178] sm:$0xff]
  %v91 = vld [vmem:[%s2 + $0x180] sm:$0xff]
  %v92 = vld [vmem:[%s2 + $0x188] sm:$0xff]
  %v93 = vld [vmem:[%s2 + $0x190] sm:$0xff]
  %v94 = vld [vmem:[%s2 + $0x198] sm:$0xff]
  %v95 = vld [vmem:[%s2 + $0x1a0] sm:$0xff]
  %v96 = vld [vmem:[%s2 + $0x1a8] sm:$0xff]
  %v97 = vld [vmem:[%s2 + $0x1b0] sm:$0xff]
  %v98 = vld [vmem:[%s2 + $0x1b8] sm:$0xff]
  %v99 = vld [vmem:[%s2 + $0x1c0] sm:$0xff]
  %v100 = vld [vmem:[%s2 + $0x1c8] sm:$0xff]
  %v101 = vld [vmem:[%s2 + $0x1d0] sm:$0xff]
  %v102 = vld [vmem:[%s2 + $0x1d8] sm:$0xff]
  %v103 = vld [vmem:[%s2 + $0x1e0] sm:$0xff]
  %v104 = vld [vmem:[%s2 + $0x1e8] sm:$0xff]
  %v105 = vld [vmem:[%s2 + $0x1f0] sm:$0xff]
  %v106 = vld [vmem:[%s2 + $0x1f8] sm:$0xff]
  %v107 = vld [vmem:[%s2 + $0x200] sm:$0xff]
  %v108 = vld [vmem:[%s2 + $0x208] sm:$0xff]
  %v109 = vld [vmem:[%s2 + $0x210] sm:$0xff]
  %v110 = vld [vmem:[%s2 + $0x218] sm:$0xff]
  %v111 = vld [vmem:[%s2 + $0x220] sm:$0xff]
  %v112 = vld [vmem:[%s2 + $0x228] sm:$0xff]
  %v113 = vld [vmem:[%s2 + $0x230] sm:$0xff]
  %v114 = vld [vmem:[%s2 + $0x238] sm:$0xff]
  %v115 = vld [vmem:[%s2 + $0x240] sm:$0xff]
  %v116 = vld [vmem:[%s2 + $0x248] sm:$0xff]
  %v117 = vld [vmem:[%s2 + $0x250] sm:$0xff]
  %v118 = vld [vmem:[%s2 + $0x258] sm:$0xff]
  %v119 = vld [vmem:[%s2 + $0x260] sm:$0xff]
  %v120 = vld [vmem:[%s2 + $0x268] sm:$0xff]
  %v121 = vld [vmem:[%s2 + $0x270] sm:$0xff]
  %v122 = vld [vmem:[%s2 + $0x278] sm:$0xff]
  %v123 = vld [vmem:[%s2 + $0x280] sm:$0xff]
  %v124 = vld [vmem:[%s2 + $0x288] sm:$0xff]
  %v125 = vld [vmem:[%s2 + $0x290] sm:$0xff]
  %v126 = vld [vmem:[%s2 + $0x298] sm:$0xff]
  %v127 = vld [vmem:[%s2 + $0x2a0] sm:$0xff]
  %v128 = vld [vmem:[%s2 + $0x2a8] sm:$0xff]
  %v129 = vld [vmem:[%s2 + $0x2b0] sm:$0xff]
  %v130 = vld [vmem:[%s2 + $0x2b8] sm:$0xff]
  %v131 = vld [vmem:[%s2 + $0x2c0] sm:$0xff]
  %v132 = vld [vmem:[%s2 + $0x2c8] sm:$0xff]
  %v133 = vld [vmem:[%s2 + $0x2d0] sm:$0xff]
  %v134 = vld [vmem:[%s2 + $0x2d8] sm:$0xff]
  %v135 = vld [vmem:[%s2 + $0x2e0] sm:$0xff]
  %v136 = vld [vmem:[%s2 + $0x2e8] sm:$0xff]
  %v137 = vld [vmem:[%s2 + $0x2f0] sm:$0xff]
  %v138 = vld [vmem:[%s2 + $0x2f8] sm:$0xff]
  %v139 = vld [vmem:[%s2 + $0x300] sm:$0xff]
  %v140 = vld [vmem:[%s2 + $0x308] sm:$0xff]
  %v141 = vld [vmem:[%s2 + $0x310] sm:$0xff]
  %v142 = vld [vmem:[%s2 + $0x318] sm:$0xff]
  %v143 = vld [vmem:[%s2 + $0x320] sm:$0xff]
  %v144 = vld [vmem:[%s2 + $0x328] sm:$0xff]
  %v145 = vld [vmem:[%s2 + $0x330] sm:$0xff]
  %v146 = vld [vmem:[%s2 + $0x338] sm:$0xff]
  %v147 = vld [vmem:[%s2 + $0x340] sm:$0xff]
  %v148 = vld [vmem:[%s2 + $0x348] sm:$0xff]
  %v149 = vld [vmem:[%s2 + $0x350] sm:$0xff]
  %v150 = vld [vmem:[%s2 + $0x358] sm:$0xff]
  %v151 = vld [vmem:[%s2 + $0x360] sm:$0xff]
  %v152 = vld [vmem:[%s2 + $0x368] sm:$0xff]
  %v153 = vld [vmem:[%s2 + $0x370] sm:$0xff]
  %v154 = vld [vmem:[%s2 + $0x378] sm:$0xff]
  %v155 = vld [vmem:[%s2 + $0x380] sm:$0xff]
  %v156 = vld [vmem:[%s2 + $0x388] sm:$0xff]
  %v157 = vld [vmem:[%s2 + $0x390] sm:$0xff]
  %v158 = vld [vmem:[%s2 + $0x398] sm:$0xff]
  %v159 = vld [vmem:[%s2 + $0x3a0] sm:$0xff]
  %v160 = vld [vmem:[%s2 + $0x3a8] sm:$0xff]
  %v161 = vld [vmem:[%s2 + $0x3b0] sm:$0xff]
  %v162 = vld [vmem:[%s2 + $0x3b8] sm:$0xff]
  %v163 = vld [vmem:[%s2 + $0x3c0] sm:$0xff]
  %v164 = vld [vmem:[%s2 + $0x3c8] sm:$0xff]
  %v165 = vld [vmem:[%s2 + $0x3d0] sm:$0xff]
  %v166 = vld [vmem:[%s2 + $0x3d8] sm:$0xff]
  %v167 = vld [vmem:[%s2 + $0x3e0] sm:$0xff]
  %v168 = vld [vmem:[%s2 + $0x3e8] sm:$0xff]
  %v169 = vld [vmem:[%s2 + $0x3f0] sm:$0xff]
  %v170 = vld [vmem:[%s2 + $0x3f8] sm:$0xff]
  %v171 = vld [vmem:[%s3] sm:$0x3]
  %v173 = vperm.slane %v171, 0
  %v174 = vperm.slane %v171, 1
  %v181 = vunpack.c.l.b16 %v39
  %v182 = vunpack.c.h.b16 %v39
  %v183 = vunpack.c.l.b16 %v40
  %v184 = vunpack.c.h.b16 %v40
  %v185 = vunpack.c.l.b16 %v41
  %v186 = vunpack.c.h.b16 %v41
  %v187 = vunpack.c.l.b16 %v42
  %v188 = vunpack.c.h.b16 %v42
  %v189 = vpack.c.b16 %v181, %v181
  %v190 = vpack.c.b16 %v182, %v182
  %v191 = vpack.c.b16 %v183, %v183
  %v192 = vpack.c.b16 %v184, %v184
  %v193 = vpack.c.b16 %v185, %v185
  %v194 = vpack.c.b16 %v186, %v186
  %v195 = vpack.c.b16 %v187, %v187
  %v196 = vpack.c.b16 %v188, %v188
  %v333 = vunpack.c.l.b16 %v43
  %v334 = vunpack.c.h.b16 %v43
  %v335 = vunpack.c.l.b16 %v44
  %v336 = vunpack.c.h.b16 %v44
  %v337 = vunpack.c.l.b16 %v45
  %v338 = vunpack.c.h.b16 %v45
  %v339 = vunpack.c.l.b16 %v46
  %v340 = vunpack.c.h.b16 %v46
  %v341 = vunpack.c.l.b16 %v47
  %v342 = vunpack.c.h.b16 %v47
  %v343 = vunpack.c.l.b16 %v48
  %v344 = vunpack.c.h.b16 %v48
  %v345 = vunpack.c.l.b16 %v49
  %v346 = vunpack.c.h.b16 %v49
  %v347 = vunpack.c.l.b16 %v50
  %v348 = vunpack.c.h.b16 %v50
  %v349 = vunpack.c.l.b16 %v51
  %v350 = vunpack.c.h.b16 %v51
  %v351 = vunpack.c.l.b16 %v52
  %v352 = vunpack.c.h.b16 %v52
  %v353 = vunpack.c.l.b16 %v53
  %v354 = vunpack.c.h.b16 %v53
  %v355 = vunpack.c.l.b16 %v54
  %v356 = vunpack.c.h.b16 %v54
  %v357 = vunpack.c.l.b16 %v55
  %v358 = vunpack.c.h.b16 %v55
  %v359 = vunpack.c.l.b16 %v56
  %v360 = vunpack.c.h.b16 %v56
  %v361 = vunpack.c.l.b16 %v57
  %v362 = vunpack.c.h.b16 %v57
  %v363 = vunpack.c.l.b16 %v58
  %v364 = vunpack.c.h.b16 %v58
  %v365 = vunpack.c.l.b16 %v59
  %v366 = vunpack.c.h.b16 %v59
  %v367 = vunpack.c.l.b16 %v60
  %v368 = vunpack.c.h.b16 %v60
  %v369 = vunpack.c.l.b16 %v61
  %v370 = vunpack.c.h.b16 %v61
  %v371 = vunpack.c.l.b16 %v62
  %v372 = vunpack.c.h.b16 %v62
  %v373 = vunpack.c.l.b16 %v63
  %v374 = vunpack.c.h.b16 %v63
  %v375 = vunpack.c.l.b16 %v64
  %v376 = vunpack.c.h.b16 %v64
  %v377 = vunpack.c.l.b16 %v65
  %v378 = vunpack.c.h.b16 %v65
  %v379 = vunpack.c.l.b16 %v66
  %v380 = vunpack.c.h.b16 %v66
  %v381 = vunpack.c.l.b16 %v67
  %v382 = vunpack.c.h.b16 %v67
  %v383 = vunpack.c.l.b16 %v68
  %v384 = vunpack.c.h.b16 %v68
  %v385 = vunpack.c.l.b16 %v69
  %v386 = vunpack.c.h.b16 %v69
  %v387 = vunpack.c.l.b16 %v70
  %v388 = vunpack.c.h.b16 %v70
  %v389 = vunpack.c.l.b16 %v71
  %v390 = vunpack.c.h.b16 %v71
  %v391 = vunpack.c.l.b16 %v72
  %v392 = vunpack.c.h.b16 %v72
  %v393 = vunpack.c.l.b16 %v73
  %v394 = vunpack.c.h.b16 %v73
  %v395 = vunpack.c.l.b16 %v74
  %v396 = vunpack.c.h.b16 %v74
  %v397 = vunpack.c.l.b16 %v75
  %v398 = vunpack.c.h.b16 %v75
  %v399 = vunpack.c.l.b16 %v76
  %v400 = vunpack.c.h.b16 %v76
  %v401 = vunpack.c.l.b16 %v77
  %v402 = vunpack.c.h.b16 %v77
  %v403 = vunpack.c.l.b16 %v78
  %v404 = vunpack.c.h.b16 %v78
  %v405 = vunpack.c.l.b16 %v79
  %v406 = vunpack.c.h.b16 %v79
  %v407 = vunpack.c.l.b16 %v80
  %v408 = vunpack.c.h.b16 %v80
  %v409 = vunpack.c.l.b16 %v81
  %v410 = vunpack.c.h.b16 %v81
  %v411 = vunpack.c.l.b16 %v82
  %v412 = vunpack.c.h.b16 %v82
  %v413 = vunpack.c.l.b16 %v83
  %v414 = vunpack.c.h.b16 %v83
  %v415 = vunpack.c.l.b16 %v84
  %v416 = vunpack.c.h.b16 %v84
  %v417 = vunpack.c.l.b16 %v85
  %v418 = vunpack.c.h.b16 %v85
  %v419 = vunpack.c.l.b16 %v86
  %v420 = vunpack.c.h.b16 %v86
  %v421 = vunpack.c.l.b16 %v87
  %v422 = vunpack.c.h.b16 %v87
  %v423 = vunpack.c.l.b16 %v88
  %v424 = vunpack.c.h.b16 %v88
  %v425 = vunpack.c.l.b16 %v89
  %v426 = vunpack.c.h.b16 %v89
  %v427 = vunpack.c.l.b16 %v90
  %v428 = vunpack.c.h.b16 %v90
  %v429 = vunpack.c.l.b16 %v91
  %v430 = vunpack.c.h.b16 %v91
  %v431 = vunpack.c.l.b16 %v92
  %v432 = vunpack.c.h.b16 %v92
  %v433 = vunpack.c.l.b16 %v93
  %v434 = vunpack.c.h.b16 %v93
  %v435 = vunpack.c.l.b16 %v94
  %v436 = vunpack.c.h.b16 %v94
  %v437 = vunpack.c.l.b16 %v95
  %v438 = vunpack.c.h.b16 %v95
  %v439 = vunpack.c.l.b16 %v96
  %v440 = vunpack.c.h.b16 %v96
  %v441 = vunpack.c.l.b16 %v97
  %v442 = vunpack.c.h.b16 %v97
  %v443 = vunpack.c.l.b16 %v98
  %v444 = vunpack.c.h.b16 %v98
  %v445 = vunpack.c.l.b16 %v99
  %v446 = vunpack.c.h.b16 %v99
  %v447 = vunpack.c.l.b16 %v100
  %v448 = vunpack.c.h.b16 %v100
  %v449 = vunpack.c.l.b16 %v101
  %v450 = vunpack.c.h.b16 %v101
  %v451 = vunpack.c.l.b16 %v102
  %v452 = vunpack.c.h.b16 %v102
  %v453 = vunpack.c.l.b16 %v103
  %v454 = vunpack.c.h.b16 %v103
  %v455 = vunpack.c.l.b16 %v104
  %v456 = vunpack.c.h.b16 %v104
  %v457 = vunpack.c.l.b16 %v105
  %v458 = vunpack.c.h.b16 %v105
  %v459 = vunpack.c.l.b16 %v106
  %v460 = vunpack.c.h.b16 %v106
  %v461 = vunpack.c.l.b16 %v107
  %v462 = vunpack.c.h.b16 %v107
  %v463 = vunpack.c.l.b16 %v108
  %v464 = vunpack.c.h.b16 %v108
  %v465 = vunpack.c.l.b16 %v109
  %v466 = vunpack.c.h.b16 %v109
  %v467 = vunpack.c.l.b16 %v110
  %v468 = vunpack.c.h.b16 %v110
  %v469 = vunpack.c.l.b16 %v111
  %v470 = vunpack.c.h.b16 %v111
  %v471 = vunpack.c.l.b16 %v112
  %v472 = vunpack.c.h.b16 %v112
  %v473 = vunpack.c.l.b16 %v113
  %v474 = vunpack.c.h.b16 %v113
  %v475 = vunpack.c.l.b16 %v114
  %v476 = vunpack.c.h.b16 %v114
  %v477 = vunpack.c.l.b16 %v115
  %v478 = vunpack.c.h.b16 %v115
  %v479 = vunpack.c.l.b16 %v116
  %v480 = vunpack.c.h.b16 %v116
  %v481 = vunpack.c.l.b16 %v117
  %v482 = vunpack.c.h.b16 %v117
  %v483 = vunpack.c.l.b16 %v118
  %v484 = vunpack.c.h.b16 %v118
  %v485 = vunpack.c.l.b16 %v119
  %v486 = vunpack.c.h.b16 %v119
  %v487 = vunpack.c.l.b16 %v120
  %v488 = vunpack.c.h.b16 %v120
  %v489 = vunpack.c.l.b16 %v121
  %v490 = vunpack.c.h.b16 %v121
  %v491 = vunpack.c.l.b16 %v122
  %v492 = vunpack.c.h.b16 %v122
  %v493 = vunpack.c.l.b16 %v123
  %v494 = vunpack.c.h.b16 %v123
  %v495 = vunpack.c.l.b16 %v124
  %v496 = vunpack.c.h.b16 %v124
  %v497 = vunpack.c.l.b16 %v125
  %v498 = vunpack.c.h.b16 %v125
  %v499 = vunpack.c.l.b16 %v126
  %v500 = vunpack.c.h.b16 %v126
  %v501 = vunpack.c.l.b16 %v127
  %v502 = vunpack.c.h.b16 %v127
  %v503 = vunpack.c.l.b16 %v128
  %v504 = vunpack.c.h.b16 %v128
  %v505 = vunpack.c.l.b16 %v129
  %v506 = vunpack.c.h.b16 %v129
  %v507 = vunpack.c.l.b16 %v130
  %v508 = vunpack.c.h.b16 %v130
  %v509 = vunpack.c.l.b16 %v131
  %v510 = vunpack.c.h.b16 %v131
  %v511 = vunpack.c.l.b16 %v132
  %v512 = vunpack.c.h.b16 %v132
  %v513 = vunpack.c.l.b16 %v133
  %v514 = vunpack.c.h.b16 %v133
  %v515 = vunpack.c.l.b16 %v134
  %v516 = vunpack.c.h.b16 %v134
  %v517 = vunpack.c.l.b16 %v135
  %v518 = vunpack.c.h.b16 %v135
  %v519 = vunpack.c.l.b16 %v136
  %v520 = vunpack.c.h.b16 %v136
  %v521 = vunpack.c.l.b16 %v137
  %v522 = vunpack.c.h.b16 %v137
  %v523 = vunpack.c.l.b16 %v138
  %v524 = vunpack.c.h.b16 %v138
  %v525 = vunpack.c.l.b16 %v139
  %v526 = vunpack.c.h.b16 %v139
  %v527 = vunpack.c.l.b16 %v140
  %v528 = vunpack.c.h.b16 %v140
  %v529 = vunpack.c.l.b16 %v141
  %v530 = vunpack.c.h.b16 %v141
  %v531 = vunpack.c.l.b16 %v142
  %v532 = vunpack.c.h.b16 %v142
  %v533 = vunpack.c.l.b16 %v143
  %v534 = vunpack.c.h.b16 %v143
  %v535 = vunpack.c.l.b16 %v144
  %v536 = vunpack.c.h.b16 %v144
  %v537 = vunpack.c.l.b16 %v145
  %v538 = vunpack.c.h.b16 %v145
  %v539 = vunpack.c.l.b16 %v146
  %v540 = vunpack.c.h.b16 %v146
  %v541 = vunpack.c.l.b16 %v147
  %v542 = vunpack.c.h.b16 %v147
  %v543 = vunpack.c.l.b16 %v148
  %v544 = vunpack.c.h.b16 %v148
  %v545 = vunpack.c.l.b16 %v149
  %v546 = vunpack.c.h.b16 %v149
  %v547 = vunpack.c.l.b16 %v150
  %v548 = vunpack.c.h.b16 %v150
  %v549 = vunpack.c.l.b16 %v151
  %v550 = vunpack.c.h.b16 %v151
  %v551 = vunpack.c.l.b16 %v152
  %v552 = vunpack.c.h.b16 %v152
  %v553 = vunpack.c.l.b16 %v153
  %v554 = vunpack.c.h.b16 %v153
  %v555 = vunpack.c.l.b16 %v154
  %v556 = vunpack.c.h.b16 %v154
  %v557 = vunpack.c.l.b16 %v155
  %v558 = vunpack.c.h.b16 %v155
  %v559 = vunpack.c.l.b16 %v156
  %v560 = vunpack.c.h.b16 %v156
  %v561 = vunpack.c.l.b16 %v157
  %v562 = vunpack.c.h.b16 %v157
  %v563 = vunpack.c.l.b16 %v158
  %v564 = vunpack.c.h.b16 %v158
  %v565 = vunpack.c.l.b16 %v159
  %v566 = vunpack.c.h.b16 %v159
  %v567 = vunpack.c.l.b16 %v160
  %v568 = vunpack.c.h.b16 %v160
  %v569 = vunpack.c.l.b16 %v161
  %v570 = vunpack.c.h.b16 %v161
  %v571 = vunpack.c.l.b16 %v162
  %v572 = vunpack.c.h.b16 %v162
  %v573 = vunpack.c.l.b16 %v163
  %v574 = vunpack.c.h.b16 %v163
  %v575 = vunpack.c.l.b16 %v164
  %v576 = vunpack.c.h.b16 %v164
  %v577 = vunpack.c.l.b16 %v165
  %v578 = vunpack.c.h.b16 %v165
  %v579 = vunpack.c.l.b16 %v166
  %v580 = vunpack.c.h.b16 %v166
  %v581 = vunpack.c.l.b16 %v167
  %v582 = vunpack.c.h.b16 %v167
  %v583 = vunpack.c.l.b16 %v168
  %v584 = vunpack.c.h.b16 %v168
  %v585 = vunpack.c.l.b16 %v169
  %v586 = vunpack.c.h.b16 %v169
  %v587 = vunpack.c.l.b16 %v170
  %v588 = vunpack.c.h.b16 %v170
  %v589 = vpack.c.b16 %v335, %v333
  %v590 = vpack.c.b16 %v336, %v334
  %v591 = vpack.c.b16 %v339, %v337
  %v592 = vpack.c.b16 %v340, %v338
  %v593 = vpack.c.b16 %v343, %v341
  %v594 = vpack.c.b16 %v344, %v342
  %v595 = vpack.c.b16 %v347, %v345
  %v596 = vpack.c.b16 %v348, %v346
  %v597 = vpack.c.b16 %v351, %v349
  %v598 = vpack.c.b16 %v352, %v350
  %v599 = vpack.c.b16 %v355, %v353
  %v600 = vpack.c.b16 %v356, %v354
  %v601 = vpack.c.b16 %v359, %v357
  %v602 = vpack.c.b16 %v360, %v358
  %v603 = vpack.c.b16 %v363, %v361
  %v604 = vpack.c.b16 %v364, %v362
  %v605 = vpack.c.b16 %v367, %v365
  %v606 = vpack.c.b16 %v368, %v366
  %v607 = vpack.c.b16 %v371, %v369
  %v608 = vpack.c.b16 %v372, %v370
  %v609 = vpack.c.b16 %v375, %v373
  %v610 = vpack.c.b16 %v376, %v374
  %v611 = vpack.c.b16 %v379, %v377
  %v612 = vpack.c.b16 %v380, %v378
  %v613 = vpack.c.b16 %v383, %v381
  %v614 = vpack.c.b16 %v384, %v382
  %v615 = vpack.c.b16 %v387, %v385
  %v616 = vpack.c.b16 %v388, %v386
  %v617 = vpack.c.b16 %v391, %v389
  %v618 = vpack.c.b16 %v392, %v390
  %v619 = vpack.c.b16 %v395, %v393
  %v620 = vpack.c.b16 %v396, %v394
  %v621 = vpack.c.b16 %v399, %v397
  %v622 = vpack.c.b16 %v400, %v398
  %v623 = vpack.c.b16 %v403, %v401
  %v624 = vpack.c.b16 %v404, %v402
  %v625 = vpack.c.b16 %v407, %v405
  %v626 = vpack.c.b16 %v408, %v406
  %v627 = vpack.c.b16 %v411, %v409
  %v628 = vpack.c.b16 %v412, %v410
  %v629 = vpack.c.b16 %v415, %v413
  %v630 = vpack.c.b16 %v416, %v414
  %v631 = vpack.c.b16 %v419, %v417
  %v632 = vpack.c.b16 %v420, %v418
  %v633 = vpack.c.b16 %v423, %v421
  %v634 = vpack.c.b16 %v424, %v422
  %v635 = vpack.c.b16 %v427, %v425
  %v636 = vpack.c.b16 %v428, %v426
  %v637 = vpack.c.b16 %v431, %v429
  %v638 = vpack.c.b16 %v432, %v430
  %v639 = vpack.c.b16 %v435, %v433
  %v640 = vpack.c.b16 %v436, %v434
  %v641 = vpack.c.b16 %v439, %v437
  %v642 = vpack.c.b16 %v440, %v438
  %v643 = vpack.c.b16 %v443, %v441
  %v644 = vpack.c.b16 %v444, %v442
  %v645 = vpack.c.b16 %v447, %v445
  %v646 = vpack.c.b16 %v448, %v446
  %v647 = vpack.c.b16 %v451, %v449
  %v648 = vpack.c.b16 %v452, %v450
  %v649 = vpack.c.b16 %v455, %v453
  %v650 = vpack.c.b16 %v456, %v454
  %v651 = vpack.c.b16 %v459, %v457
  %v652 = vpack.c.b16 %v460, %v458
  %v653 = vpack.c.b16 %v463, %v461
  %v654 = vpack.c.b16 %v464, %v462
  %v655 = vpack.c.b16 %v467, %v465
  %v656 = vpack.c.b16 %v468, %v466
  %v657 = vpack.c.b16 %v471, %v469
  %v658 = vpack.c.b16 %v472, %v470
  %v659 = vpack.c.b16 %v475, %v473
  %v660 = vpack.c.b16 %v476, %v474
  %v661 = vpack.c.b16 %v479, %v477
  %v662 = vpack.c.b16 %v480, %v478
  %v663 = vpack.c.b16 %v483, %v481
  %v664 = vpack.c.b16 %v484, %v482
  %v665 = vpack.c.b16 %v487, %v485
  %v666 = vpack.c.b16 %v488, %v486
  %v667 = vpack.c.b16 %v491, %v489
  %v668 = vpack.c.b16 %v492, %v490
  %v669 = vpack.c.b16 %v495, %v493
  %v670 = vpack.c.b16 %v496, %v494
  %v671 = vpack.c.b16 %v499, %v497
  %v672 = vpack.c.b16 %v500, %v498
  %v673 = vpack.c.b16 %v503, %v501
  %v674 = vpack.c.b16 %v504, %v502
  %v675 = vpack.c.b16 %v507, %v505
  %v676 = vpack.c.b16 %v508, %v506
  %v677 = vpack.c.b16 %v511, %v509
  %v678 = vpack.c.b16 %v512, %v510
  %v679 = vpack.c.b16 %v515, %v513
  %v680 = vpack.c.b16 %v516, %v514
  %v681 = vpack.c.b16 %v519, %v517
  %v682 = vpack.c.b16 %v520, %v518
  %v683 = vpack.c.b16 %v523, %v521
  %v684 = vpack.c.b16 %v524, %v522
  %v685 = vpack.c.b16 %v527, %v525
  %v686 = vpack.c.b16 %v528, %v526
  %v687 = vpack.c.b16 %v531, %v529
  %v688 = vpack.c.b16 %v532, %v530
  %v689 = vpack.c.b16 %v535, %v533
  %v690 = vpack.c.b16 %v536, %v534
  %v691 = vpack.c.b16 %v539, %v537
  %v692 = vpack.c.b16 %v540, %v538
  %v693 = vpack.c.b16 %v543, %v541
  %v694 = vpack.c.b16 %v544, %v542
  %v695 = vpack.c.b16 %v547, %v545
  %v696 = vpack.c.b16 %v548, %v546
  %v697 = vpack.c.b16 %v551, %v549
  %v698 = vpack.c.b16 %v552, %v550
  %v699 = vpack.c.b16 %v555, %v553
  %v700 = vpack.c.b16 %v556, %v554
  %v701 = vpack.c.b16 %v559, %v557
  %v702 = vpack.c.b16 %v560, %v558
  %v703 = vpack.c.b16 %v563, %v561
  %v704 = vpack.c.b16 %v564, %v562
  %v705 = vpack.c.b16 %v567, %v565
  %v706 = vpack.c.b16 %v568, %v566
  %v707 = vpack.c.b16 %v571, %v569
  %v708 = vpack.c.b16 %v572, %v570
  %v709 = vpack.c.b16 %v575, %v573
  %v710 = vpack.c.b16 %v576, %v574
  %v711 = vpack.c.b16 %v579, %v577
  %v712 = vpack.c.b16 %v580, %v578
  %v713 = vpack.c.b16 %v583, %v581
  %v714 = vpack.c.b16 %v584, %v582
  %v715 = vpack.c.b16 %v587, %v585
  %v716 = vpack.c.b16 %v588, %v586
  %845 = vmatpush.bf16.msra.mxu0 %v603
  %846 = vmatpush.bf16.msra.mxu0 %v601
  %847 = vmatpush.bf16.msra.mxu0 %v599
  %848 = vmatpush.bf16.msra.mxu0 %v597
  %849 = vmatpush.bf16.msra.mxu0 %v595
  %850 = vmatpush.bf16.msra.mxu0 %v593
  %851 = vmatpush.bf16.msra.mxu0 %v591
  %852 = vmatpush.bf16.msra.mxu0 %v589
  %853 = vmatmul.bf16.gmra.mxu0 %v189
  %v854 = vpop.f32.mrf.mxu0
  %v855 = vadd.f32 %v173, %v854
  %v856 = vpop.f32.mrf.mxu0
  %857 = vdwg.mxu0
  %858 = vmatpush.bf16.msra.mxu0 %v619
  %859 = vmatpush.bf16.msra.mxu0 %v617
  %860 = vmatpush.bf16.msra.mxu0 %v615
  %861 = vmatpush.bf16.msra.mxu0 %v613
  %862 = vmatpush.bf16.msra.mxu0 %v611
  %863 = vmatpush.bf16.msra.mxu0 %v609
  %864 = vmatpush.bf16.msra.mxu0 %v607
  %865 = vmatpush.bf16.msra.mxu0 %v605
  %866 = vmatmul.bf16.gmra.mxu0 %v190
  %v867 = vpop.f32.mrf.mxu0
  %v868 = vadd.f32 %v855, %v867
  %v869 = vpop.f32.mrf.mxu0
  %870 = vdwg.mxu0
  %871 = vmatpush.bf16.msra.mxu0 %v635
  %872 = vmatpush.bf16.msra.mxu0 %v633
  %873 = vmatpush.bf16.msra.mxu0 %v631
  %874 = vmatpush.bf16.msra.mxu0 %v629
  %875 = vmatpush.bf16.msra.mxu0 %v627
  %876 = vmatpush.bf16.msra.mxu0 %v625
  %877 = vmatpush.bf16.msra.mxu0 %v623
  %878 = vmatpush.bf16.msra.mxu0 %v621
  %879 = vmatmul.bf16.gmra.mxu0 %v191
  %v880 = vpop.f32.mrf.mxu0
  %v881 = vadd.f32 %v868, %v880
  %v882 = vpop.f32.mrf.mxu0
  %883 = vdwg.mxu0
  %884 = vmatpush.bf16.msra.mxu0 %v651
  %885 = vmatpush.bf16.msra.mxu0 %v649
  %886 = vmatpush.bf16.msra.mxu0 %v647
  %887 = vmatpush.bf16.msra.mxu0 %v645
  %888 = vmatpush.bf16.msra.mxu0 %v643
  %889 = vmatpush.bf16.msra.mxu0 %v641
  %890 = vmatpush.bf16.msra.mxu0 %v639
  %891 = vmatpush.bf16.msra.mxu0 %v637
  %892 = vmatmul.bf16.gmra.mxu0 %v192
  %v893 = vpop.f32.mrf.mxu0
  %v894 = vadd.f32 %v881, %v893
  %v895 = vpop.f32.mrf.mxu0
  %896 = vdwg.mxu0
  %897 = vmatpush.bf16.msra.mxu0 %v667
  %898 = vmatpush.bf16.msra.mxu0 %v665
  %899 = vmatpush.bf16.msra.mxu0 %v663
  %900 = vmatpush.bf16.msra.mxu0 %v661
  %901 = vmatpush.bf16.msra.mxu0 %v659
  %902 = vmatpush.bf16.msra.mxu0 %v657
  %903 = vmatpush.bf16.msra.mxu0 %v655
  %904 = vmatpush.bf16.msra.mxu0 %v653
  %905 = vmatmul.bf16.gmra.mxu0 %v193
  %v906 = vpop.f32.mrf.mxu0
  %v907 = vadd.f32 %v894, %v906
  %v908 = vpop.f32.mrf.mxu0
  %909 = vdwg.mxu0
  %910 = vmatpush.bf16.msra.mxu0 %v683
  %911 = vmatpush.bf16.msra.mxu0 %v681
  %912 = vmatpush.bf16.msra.mxu0 %v679
  %913 = vmatpush.bf16.msra.mxu0 %v677
  %914 = vmatpush.bf16.msra.mxu0 %v675
  %915 = vmatpush.bf16.msra.mxu0 %v673
  %916 = vmatpush.bf16.msra.mxu0 %v671
  %917 = vmatpush.bf16.msra.mxu0 %v669
  %918 = vmatmul.bf16.gmra.mxu0 %v194
  %v919 = vpop.f32.mrf.mxu0
  %v920 = vadd.f32 %v907, %v919
  %v921 = vpop.f32.mrf.mxu0
  %922 = vdwg.mxu0
  %923 = vmatpush.bf16.msra.mxu0 %v699
  %924 = vmatpush.bf16.msra.mxu0 %v697
  %925 = vmatpush.bf16.msra.mxu0 %v695
  %926 = vmatpush.bf16.msra.mxu0 %v693
  %927 = vmatpush.bf16.msra.mxu0 %v691
  %928 = vmatpush.bf16.msra.mxu0 %v689
  %929 = vmatpush.bf16.msra.mxu0 %v687
  %930 = vmatpush.bf16.msra.mxu0 %v685
  %931 = vmatmul.bf16.gmra.mxu0 %v195
  %v932 = vpop.f32.mrf.mxu0
  %v933 = vadd.f32 %v920, %v932
  %v934 = vpop.f32.mrf.mxu0
  %935 = vdwg.mxu0
  %936 = vmatpush.bf16.msra.mxu0 %v715
  %937 = vmatpush.bf16.msra.mxu0 %v713
  %938 = vmatpush.bf16.msra.mxu0 %v711
  %939 = vmatpush.bf16.msra.mxu0 %v709
  %940 = vmatpush.bf16.msra.mxu0 %v707
  %941 = vmatpush.bf16.msra.mxu0 %v705
  %942 = vmatpush.bf16.msra.mxu0 %v703
  %943 = vmatpush.bf16.msra.mxu0 %v701
  %944 = vmatmul.bf16.gmra.mxu0 %v196
  %v945 = vpop.f32.mrf.mxu0
  %v946 = vadd.f32 %v933, %v945
  %v947 = vpop.f32.mrf.mxu0
  %948 = vdwg.mxu0
  %949 = vmatpush.bf16.msra.mxu0 %v604
  %950 = vmatpush.bf16.msra.mxu0 %v602
  %951 = vmatpush.bf16.msra.mxu0 %v600
  %952 = vmatpush.bf16.msra.mxu0 %v598
  %953 = vmatpush.bf16.msra.mxu0 %v596
  %954 = vmatpush.bf16.msra.mxu0 %v594
  %955 = vmatpush.bf16.msra.mxu0 %v592
  %956 = vmatpush.bf16.msra.mxu0 %v590
  %957 = vmatmul.bf16.gmra.mxu0 %v189
  %v958 = vpop.f32.mrf.mxu0
  %v959 = vadd.f32 %v174, %v958
  %v960 = vpop.f32.mrf.mxu0
  %961 = vdwg.mxu0
  %962 = vmatpush.bf16.msra.mxu0 %v620
  %963 = vmatpush.bf16.msra.mxu0 %v618
  %964 = vmatpush.bf16.msra.mxu0 %v616
  %965 = vmatpush.bf16.msra.mxu0 %v614
  %966 = vmatpush.bf16.msra.mxu0 %v612
  %967 = vmatpush.bf16.msra.mxu0 %v610
  %968 = vmatpush.bf16.msra.mxu0 %v608
  %969 = vmatpush.bf16.msra.mxu0 %v606
  %970 = vmatmul.bf16.gmra.mxu0 %v190
  %v971 = vpop.f32.mrf.mxu0
  %v972 = vadd.f32 %v959, %v971
  %v973 = vpop.f32.mrf.mxu0
  %974 = vdwg.mxu0
  %975 = vmatpush.bf16.msra.mxu0 %v636
  %976 = vmatpush.bf16.msra.mxu0 %v634
  %977 = vmatpush.bf16.msra.mxu0 %v632
  %978 = vmatpush.bf16.msra.mxu0 %v630
  %979 = vmatpush.bf16.msra.mxu0 %v628
  %980 = vmatpush.bf16.msra.mxu0 %v626
  %981 = vmatpush.bf16.msra.mxu0 %v624
  %982 = vmatpush.bf16.msra.mxu0 %v622
  %983 = vmatmul.bf16.gmra.mxu0 %v191
  %v984 = vpop.f32.mrf.mxu0
  %v985 = vadd.f32 %v972, %v984
  %v986 = vpop.f32.mrf.mxu0
  %987 = vdwg.mxu0
  %988 = vmatpush.bf16.msra.mxu0 %v652
  %989 = vmatpush.bf16.msra.mxu0 %v650
  %990 = vmatpush.bf16.msra.mxu0 %v648
  %991 = vmatpush.bf16.msra.mxu0 %v646
  %992 = vmatpush.bf16.msra.mxu0 %v644
  %993 = vmatpush.bf16.msra.mxu0 %v642
  %994 = vmatpush.bf16.msra.mxu0 %v640
  %995 = vmatpush.bf16.msra.mxu0 %v638
  %996 = vmatmul.bf16.gmra.mxu0 %v192
  %v997 = vpop.f32.mrf.mxu0
  %v998 = vadd.f32 %v985, %v997
  %v999 = vpop.f32.mrf.mxu0
  %1000 = vdwg.mxu0
  %1001 = vmatpush.bf16.msra.mxu0 %v668
  %1002 = vmatpush.bf16.msra.mxu0 %v666
  %1003 = vmatpush.bf16.msra.mxu0 %v664
  %1004 = vmatpush.bf16.msra.mxu0 %v662
  %1005 = vmatpush.bf16.msra.mxu0 %v660
  %1006 = vmatpush.bf16.msra.mxu0 %v658
  %1007 = vmatpush.bf16.msra.mxu0 %v656
  %1008 = vmatpush.bf16.msra.mxu0 %v654
  %1009 = vmatmul.bf16.gmra.mxu0 %v193
  %v1010 = vpop.f32.mrf.mxu0
  %v1011 = vadd.f32 %v998, %v1010
  %v1012 = vpop.f32.mrf.mxu0
  %1013 = vdwg.mxu0
  %1014 = vmatpush.bf16.msra.mxu0 %v684
  %1015 = vmatpush.bf16.msra.mxu0 %v682
  %1016 = vmatpush.bf16.msra.mxu0 %v680
  %1017 = vmatpush.bf16.msra.mxu0 %v678
  %1018 = vmatpush.bf16.msra.mxu0 %v676
  %1019 = vmatpush.bf16.msra.mxu0 %v674
  %1020 = vmatpush.bf16.msra.mxu0 %v672
  %1021 = vmatpush.bf16.msra.mxu0 %v670
  %1022 = vmatmul.bf16.gmra.mxu0 %v194
  %v1023 = vpop.f32.mrf.mxu0
  %v1024 = vadd.f32 %v1011, %v1023
  %v1025 = vpop.f32.mrf.mxu0
  %1026 = vdwg.mxu0
  %1027 = vmatpush.bf16.msra.mxu0 %v700
  %1028 = vmatpush.bf16.msra.mxu0 %v698
  %1029 = vmatpush.bf16.msra.mxu0 %v696
  %1030 = vmatpush.bf16.msra.mxu0 %v694
  %1031 = vmatpush.bf16.msra.mxu0 %v692
  %1032 = vmatpush.bf16.msra.mxu0 %v690
  %1033 = vmatpush.bf16.msra.mxu0 %v688
  %1034 = vmatpush.bf16.msra.mxu0 %v686
  %1035 = vmatmul.bf16.gmra.mxu0 %v195
  %v1036 = vpop.f32.mrf.mxu0
  %v1037 = vadd.f32 %v1024, %v1036
  %v1038 = vpop.f32.mrf.mxu0
  %1039 = vdwg.mxu0
  %1040 = vmatpush.bf16.msra.mxu0 %v716
  %1041 = vmatpush.bf16.msra.mxu0 %v714
  %1042 = vmatpush.bf16.msra.mxu0 %v712
  %1043 = vmatpush.bf16.msra.mxu0 %v710
  %1044 = vmatpush.bf16.msra.mxu0 %v708
  %1045 = vmatpush.bf16.msra.mxu0 %v706
  %1046 = vmatpush.bf16.msra.mxu0 %v704
  %1047 = vmatpush.bf16.msra.mxu0 %v702
  %1048 = vmatmul.bf16.gmra.mxu0 %v196
  %v1049 = vpop.f32.mrf.mxu0
  %v1050 = vadd.f32 %v1037, %v1049
  %v1051 = vpop.f32.mrf.mxu0
  %1052 = vdwg.mxu0
  %v1053 = vmax.f32 %v946, 0.0
  %v1054 = vmax.f32 %v1050, 0.0
  %v1055 = vpack.c.bf16 %v1053, %v1053
  %v1056 = vpack.c.bf16 %v1054, %v1054
  %v1057 = vld [vmem:[%s4] sm:$0xf]
  %v1058 = vld [vmem:[%s4 + $0x4] sm:$0xf]
  %v1059 = vld [vmem:[%s4 + $0x8] sm:$0xf]
  %v1060 = vld [vmem:[%s4 + $0xc] sm:$0xf]
  %v1061 = vld [vmem:[%s4 + $0x10] sm:$0xf]
  %v1062 = vld [vmem:[%s4 + $0x14] sm:$0xf]
  %v1063 = vld [vmem:[%s4 + $0x18] sm:$0xf]
  %v1064 = vld [vmem:[%s4 + $0x1c] sm:$0xf]
  %v1065 = vld [vmem:[%s4 + $0x20] sm:$0xf]
  %v1066 = vld [vmem:[%s4 + $0x24] sm:$0xf]
  %v1067 = vld [vmem:[%s4 + $0x28] sm:$0xf]
  %v1068 = vld [vmem:[%s4 + $0x2c] sm:$0xf]
  %v1069 = vld [vmem:[%s4 + $0x30] sm:$0xf]
  %v1070 = vld [vmem:[%s4 + $0x34] sm:$0xf]
  %v1071 = vld [vmem:[%s4 + $0x38] sm:$0xf]
  %v1072 = vld [vmem:[%s4 + $0x3c] sm:$0xf]
  %v1073 = vld [vmem:[%s4 + $0x40] sm:$0xf]
  %v1074 = vld [vmem:[%s4 + $0x44] sm:$0xf]
  %v1075 = vld [vmem:[%s4 + $0x48] sm:$0xf]
  %v1076 = vld [vmem:[%s4 + $0x4c] sm:$0xf]
  %v1077 = vld [vmem:[%s4 + $0x50] sm:$0xf]
  %v1078 = vld [vmem:[%s4 + $0x54] sm:$0xf]
  %v1079 = vld [vmem:[%s4 + $0x58] sm:$0xf]
  %v1080 = vld [vmem:[%s4 + $0x5c] sm:$0xf]
  %v1081 = vld [vmem:[%s4 + $0x60] sm:$0xf]
  %v1082 = vld [vmem:[%s4 + $0x64] sm:$0xf]
  %v1083 = vld [vmem:[%s4 + $0x68] sm:$0xf]
  %v1084 = vld [vmem:[%s4 + $0x6c] sm:$0xf]
  %v1085 = vld [vmem:[%s4 + $0x70] sm:$0xf]
  %v1086 = vld [vmem:[%s4 + $0x74] sm:$0xf]
  %v1087 = vld [vmem:[%s4 + $0x78] sm:$0xf]
  %v1088 = vld [vmem:[%s4 + $0x7c] sm:$0xf]
  %v1089 = vld [vmem:[%s5] sm:$0x1]
  %v1091 = vperm.slane %v1089, 0
  %v1125 = vunpack.c.l.b16 %v1057
  %v1126 = vunpack.c.l.b16 %v1058
  %v1127 = vunpack.c.l.b16 %v1059
  %v1128 = vunpack.c.l.b16 %v1060
  %v1129 = vunpack.c.l.b16 %v1061
  %v1130 = vunpack.c.l.b16 %v1062
  %v1131 = vunpack.c.l.b16 %v1063
  %v1132 = vunpack.c.l.b16 %v1064
  %v1133 = vunpack.c.l.b16 %v1065
  %v1134 = vunpack.c.l.b16 %v1066
  %v1135 = vunpack.c.l.b16 %v1067
  %v1136 = vunpack.c.l.b16 %v1068
  %v1137 = vunpack.c.l.b16 %v1069
  %v1138 = vunpack.c.l.b16 %v1070
  %v1139 = vunpack.c.l.b16 %v1071
  %v1140 = vunpack.c.l.b16 %v1072
  %v1141 = vunpack.c.l.b16 %v1073
  %v1142 = vunpack.c.l.b16 %v1074
  %v1143 = vunpack.c.l.b16 %v1075
  %v1144 = vunpack.c.l.b16 %v1076
  %v1145 = vunpack.c.l.b16 %v1077
  %v1146 = vunpack.c.l.b16 %v1078
  %v1147 = vunpack.c.l.b16 %v1079
  %v1148 = vunpack.c.l.b16 %v1080
  %v1149 = vunpack.c.l.b16 %v1081
  %v1150 = vunpack.c.l.b16 %v1082
  %v1151 = vunpack.c.l.b16 %v1083
  %v1152 = vunpack.c.l.b16 %v1084
  %v1153 = vunpack.c.l.b16 %v1085
  %v1154 = vunpack.c.l.b16 %v1086
  %v1155 = vunpack.c.l.b16 %v1087
  %v1156 = vunpack.c.l.b16 %v1088
  %v1157 = vpack.c.b16 %v1126, %v1125
  %v1158 = vpack.c.b16 %v1128, %v1127
  %v1159 = vpack.c.b16 %v1130, %v1129
  %v1160 = vpack.c.b16 %v1132, %v1131
  %v1161 = vpack.c.b16 %v1134, %v1133
  %v1162 = vpack.c.b16 %v1136, %v1135
  %v1163 = vpack.c.b16 %v1138, %v1137
  %v1164 = vpack.c.b16 %v1140, %v1139
  %v1165 = vpack.c.b16 %v1142, %v1141
  %v1166 = vpack.c.b16 %v1144, %v1143
  %v1167 = vpack.c.b16 %v1146, %v1145
  %v1168 = vpack.c.b16 %v1148, %v1147
  %v1169 = vpack.c.b16 %v1150, %v1149
  %v1170 = vpack.c.b16 %v1152, %v1151
  %v1171 = vpack.c.b16 %v1154, %v1153
  %v1172 = vpack.c.b16 %v1156, %v1155
  %1189 = vmatpush.bf16.msra.mxu0 %v1164
  %1190 = vmatpush.bf16.msra.mxu0 %v1163
  %1191 = vmatpush.bf16.msra.mxu0 %v1162
  %1192 = vmatpush.bf16.msra.mxu0 %v1161
  %1193 = vmatpush.bf16.msra.mxu0 %v1160
  %1194 = vmatpush.bf16.msra.mxu0 %v1159
  %1195 = vmatpush.bf16.msra.mxu0 %v1158
  %1196 = vmatpush.bf16.msra.mxu0 %v1157
  %1197 = vmatmul.bf16.gmra.mxu0 %v1055
  %v1198 = vpop.f32.mrf.mxu0
  %v1199 = vadd.f32 %v1091, %v1198
  %v1200 = vpop.f32.mrf.mxu0
  %1201 = vdwg.mxu0
  %1202 = vmatpush.bf16.msra.mxu0 %v1172
  %1203 = vmatpush.bf16.msra.mxu0 %v1171
  %1204 = vmatpush.bf16.msra.mxu0 %v1170
  %1205 = vmatpush.bf16.msra.mxu0 %v1169
  %1206 = vmatpush.bf16.msra.mxu0 %v1168
  %1207 = vmatpush.bf16.msra.mxu0 %v1167
  %1208 = vmatpush.bf16.msra.mxu0 %v1166
  %1209 = vmatpush.bf16.msra.mxu0 %v1165
  %1210 = vmatmul.bf16.gmra.mxu0 %v1056
  %v1211 = vpop.f32.mrf.mxu0
  %v1212 = vadd.f32 %v1199, %v1211
  %v1213 = vpop.f32.mrf.mxu0
  %1214 = vdwg.mxu0
  %v1215 = vmax.f32 %v1212, 0.0
  %v1216 = vpack.c.bf16 %v1215, %v1215
  %vm1217 = vcmask 253952
  %1218 = vst.msk [vmem:[#allocation2] sm:$0x1] %vm1217, %v1216
  %1220 = vst [vmem:[#allocation1] sm:$0xff] %v1216
  %s1221 = scalar_lea.vmem [#allocation1], 1
  %v1222 = vld [vmem:[%s1221] ss:$4 sm:$0xff]
  %1224 = vrot.lane.b32.xlu0 %v1222, 32
  %v1225 = vpop.permute.xlu0 %1224
  %vm1227 = vcmask 516352
  %1228 = vst.msk [vmem:[#allocation2] sm:$0x1] %vm1227, %v1225
  %1229 = vst [vmem:[#allocation1] sm:$0xff] %v1216
  %s1230 = scalar_lea.vmem [#allocation1], 2
  %v1231 = vld [vmem:[%s1230] ss:$4 sm:$0xff]
  %1233 = vrot.lane.b32.xlu0 %v1231, 64
  %v1234 = vpop.permute.xlu0 %1233
  %vm1236 = vcmask 778752
  %1237 = vst.msk [vmem:[#allocation2] sm:$0x1] %vm1236, %v1234
  %1238 = vst [vmem:[#allocation1] sm:$0xff] %v1216
  %s1239 = scalar_lea.vmem [#allocation1], 3
  %v1240 = vld [vmem:[%s1239] ss:$4 sm:$0xff]
  %1242 = vrot.lane.b32.xlu0 %v1240, 96
  %v1243 = vpop.permute.xlu0 %1242
  %vm1245 = vcmask 1041152
  %1246 = vst.msk [vmem:[#allocation2] sm:$0x1] %vm1245, %v1243
  %v1247 = vld [vmem:[#allocation2] sm:$0x1]
  %v1248 = vld [vmem:[%s6] sm:$0xf]
  %v1249 = vld [vmem:[%s6 + $0x4] sm:$0xf]
  %v1250 = vld [vmem:[%s6 + $0x8] sm:$0xf]
  %v1251 = vld [vmem:[%s6 + $0xc] sm:$0xf]
  %v1252 = vld [vmem:[%s6 + $0x10] sm:$0xf]
  %v1253 = vld [vmem:[%s6 + $0x14] sm:$0xf]
  %v1254 = vld [vmem:[%s6 + $0x18] sm:$0xf]
  %v1255 = vld [vmem:[%s6 + $0x1c] sm:$0xf]
  %v1256 = vld [vmem:[%s6 + $0x20] sm:$0xf]
  %v1257 = vld [vmem:[%s6 + $0x24] sm:$0xf]
  %v1258 = vld [vmem:[%s6 + $0x28] sm:$0xf]
  %v1259 = vld [vmem:[%s6 + $0x2c] sm:$0xf]
  %v1260 = vld [vmem:[%s6 + $0x30] sm:$0xf]
  %v1261 = vld [vmem:[%s6 + $0x34] sm:$0xf]
  %v1262 = vld [vmem:[%s6 + $0x38] sm:$0xf]
  %v1263 = vld [vmem:[%s6 + $0x3c] sm:$0xf]
  %v1264 = vld [vmem:[%s1] sm:$0x3]
  %v1265 = vld [vmem:[%s7] sm:$0x1]
  %1267 = vset.pattern.permute.xlu0 0
  %1268 = vperm.xlu0 %1267, %v1264
  %v1269 = vpop.permute.xlu0 %1268
  %v1271 = vperm.slane %v1265, 0
  %v1272 = vmul.f32 %v1269, %v1271
  %v1289 = vunpack.c.l.b16 %v1248
  %v1290 = vunpack.c.l.b16 %v1249
  %v1291 = vunpack.c.l.b16 %v1250
  %v1292 = vunpack.c.l.b16 %v1251
  %v1293 = vunpack.c.l.b16 %v1252
  %v1294 = vunpack.c.l.b16 %v1253
  %v1295 = vunpack.c.l.b16 %v1254
  %v1296 = vunpack.c.l.b16 %v1255
  %v1297 = vunpack.c.l.b16 %v1256
  %v1298 = vunpack.c.l.b16 %v1257
  %v1299 = vunpack.c.l.b16 %v1258
  %v1300 = vunpack.c.l.b16 %v1259
  %v1301 = vunpack.c.l.b16 %v1260
  %v1302 = vunpack.c.l.b16 %v1261
  %v1303 = vunpack.c.l.b16 %v1262
  %v1304 = vunpack.c.l.b16 %v1263
  %v1305 = vpack.c.b16 %v1290, %v1289
  %v1306 = vpack.c.b16 %v1292, %v1291
  %v1307 = vpack.c.b16 %v1294, %v1293
  %v1308 = vpack.c.b16 %v1296, %v1295
  %v1309 = vpack.c.b16 %v1298, %v1297
  %v1310 = vpack.c.b16 %v1300, %v1299
  %v1311 = vpack.c.b16 %v1302, %v1301
  %v1312 = vpack.c.b16 %v1304, %v1303
  %1321 = vmatpush.bf16.msra.mxu0 %v1312
  %1322 = vmatpush.bf16.msra.mxu0 %v1311
  %1323 = vmatpush.bf16.msra.mxu0 %v1310
  %1324 = vmatpush.bf16.msra.mxu0 %v1309
  %1325 = vmatpush.bf16.msra.mxu0 %v1308
  %1326 = vmatpush.bf16.msra.mxu0 %v1307
  %1327 = vmatpush.bf16.msra.mxu0 %v1306
  %1328 = vmatpush.bf16.msra.mxu0 %v1305
  %1329 = vmatmul.bf16.gmra.mxu0 %v1247
  %v1330 = vpop.f32.mrf.mxu0
  %v1331 = vadd.f32 %v1272, %v1330
  %v1332 = vpop.f32.mrf.mxu0
  %1333 = vdwg.mxu0
  %v1334 = vld [vmem:[%s7 + $0x1] sm:$0x1]
  %1335 = vset.pattern.permute.xlu0 1
  %1336 = vperm.xlu0 %1335, %v1264
  %v1337 = vpop.permute.xlu0 %1336
  %v1339 = vperm.slane %v1334, 0
  %v1340 = vmul.f32 %v1337, %v1339
  %v1341 = vadd.f32 %v1331, %v1340
  %v1342 = vld [vmem:[%s8] sm:$0x1]
  %v1344 = vperm.slane %v1342, 0
  %v1346 = vadd.f32 %v1341, %v1344
  %v1347 = vmax.f32 %v1346, 0.0
  %v1348 = vpack.c.bf16 %v1347, %v1347
  %v1349 = vld [vmem:[%s9] sm:$0xf]
  %v1350 = vld [vmem:[%s9 + $0x4] sm:$0xf]
  %v1351 = vld [vmem:[%s9 + $0x8] sm:$0xf]
  %v1352 = vld [vmem:[%s9 + $0xc] sm:$0xf]
  %v1353 = vld [vmem:[%s9 + $0x10] sm:$0xf]
  %v1354 = vld [vmem:[%s9 + $0x14] sm:$0xf]
  %v1355 = vld [vmem:[%s9 + $0x18] sm:$0xf]
  %v1356 = vld [vmem:[%s9 + $0x1c] sm:$0xf]
  %v1357 = vld [vmem:[%s10] sm:$0x1]
  %v1359 = vperm.slane %v1357, 0
  %v1369 = vunpack.c.l.b16 %v1349
  %v1370 = vunpack.c.l.b16 %v1350
  %v1371 = vunpack.c.l.b16 %v1351
  %v1372 = vunpack.c.l.b16 %v1352
  %v1373 = vunpack.c.l.b16 %v1353
  %v1374 = vunpack.c.l.b16 %v1354
  %v1375 = vunpack.c.l.b16 %v1355
  %v1376 = vunpack.c.l.b16 %v1356
  %v1377 = vpack.c.b16 %v1370, %v1369
  %v1378 = vpack.c.b16 %v1372, %v1371
  %v1379 = vpack.c.b16 %v1374, %v1373
  %v1380 = vpack.c.b16 %v1376, %v1375
  %vm1385 = vcmask 523264
  %v1387 = vsel %vm1385, %v1348, 0
  %1389 = vmatpush.bf16.msra.mxu0 0
  %1390 = vmatpush.bf16.msra.mxu0 0
  %1391 = vmatpush.bf16.msra.mxu0 0
  %1392 = vmatpush.bf16.msra.mxu0 0
  %1393 = vmatpush.bf16.msra.mxu0 %v1380
  %1394 = vmatpush.bf16.msra.mxu0 %v1379
  %1395 = vmatpush.bf16.msra.mxu0 %v1378
  %1396 = vmatpush.bf16.msra.mxu0 %v1377
  %1397 = vmatmul.bf16.gmra.mxu0 %v1387
  %v1398 = vpop.f32.mrf.mxu0
  %v1399 = vadd.f32 %v1359, %v1398
  %v1400 = vpop.f32.mrf.mxu0
  %1401 = vdwg.mxu0
  %v1402 = vlaneseq
  %v1403 = vand.u32 %v1402, 127
  %vm1404 = vcmp.ge.s32.totalorder %v1403, 1
  %vm1405 = vcmp.le.s32.totalorder %v1403, 4
  %vm1406 = vmand %vm1404, %vm1405
  %v1407 = vsel %vm1406, %v1399, -inf
  %vm1408 = vcmask 1041408
  %v1409 = vsel %vm1408, %v1407, -inf
  %1410 = vmax.xlane.f32.xlu0 %v1409
  %v1411 = vpop.xlane.xlu0 %1410
  %v1412 = vsub.f32 %v1407, %v1411
  %v1413 = vmul.f32 %v1412, 1.442695
  %v1414 = vpow.pop %v1413
  %v1415 = vsel %vm1408, %v1414, 0.0
  %1416 = vadd.xlane.f32.xlu0 %v1415
  %v1417 = vpop.xlane.xlu0 %1416
  %v1418 = vrcp.pop %v1417
  %v1419 = vmul.f32 %v1417, %v1418
  %v1420 = vsub.f32 1.0, %v1419
  %v1421 = vmul.f32 %v1418, %v1420
  %v1422 = vadd.f32 %v1418, %v1421
  %vm1423 = vweird.f32 %v1417
  %vm1424 = vweird.f32 %v1418
  %vm1425 = vmor %vm1423, %vm1424
  %v1426 = vsel %vm1425, %v1418, %v1422
  %v1427 = vand.u32 2147483647, %v1417
  %vm1428 = vcmp.eq.f32.partialorder %v1427, 8.507059e+37
  %v1429 = vand.u32 %v1417, 2147483648
  %v1430 = vor.u32 1.1754944e-38, %v1429
  %v1431 = vsel %vm1428, %v1430, %v1426
  %v1432 = vmul.f32 %v1414, %v1431
  %vm1433 = vcmp.eq.s32.totalorder %v1403, 0
  %v1434 = vsel %vm1433, %v1399, %v1432
  %1435 = vst [vmem:[%s11] sm:$0x3] %v1434
  // Predicated region
  $region46: #{ppo_policy_forward.1} parent=0 // pred_check
    _
  $region47: #{ppo_policy_forward.1} parent=0 // pred_check_branch
    %1437 = sbr.rel (0) target = $region49
  $region48: #{ppo_policy_forward.1} parent=0 // pred_region
    _
  $region49: #{ppo_policy_forward.1} parent=0 // pred_fallthru
    _
  // Predicated region
  $region50: #{ppo_policy_forward.1} parent=0 // pred_check
    _
  $region51: #{ppo_policy_forward.1} parent=0 // pred_check_branch
    %1439 = sbr.rel (0) target = $region53
  $region52: #{ppo_policy_forward.1} parent=0 // pred_region
    _
  $region53: #{ppo_policy_forward.1} parent=0 // pred_fallthru
    _

</llo_original>
